<compile_context>
chip_gen: v5e
topology: v5e:2x2
jax: 0.10.0
libtpu: 0.0.40
codegen_flags: <defaults>
</compile_context>

<pallas_src>
import functools

import jax
import jax.numpy as jnp
from jax.experimental import pallas as pl
from jax.experimental.pallas import tpu as pltpu

BIG = 1.0e12
_SUBLANE = 8
_LANE = 128


def _num_parts():
    # v7x has 2 TensorCores per chip; v5e/v6e are single-TC, where a parts split
    # only adds overshoot blocks and a second finalize.
    try:
        kind = jax.devices()[0].device_kind.lower()
    except Exception:
        return 1
    return 2 if "v7" in kind else 1


def _mlcce_kernel(y_pred_ref, y_true_ref, out_ref, acc_ref, *,
                  tile_r, rows, rows_per_part):
    i = pl.program_id(1)                      # row-tile index within this part

    @pl.when(i == 0)
    def _init():
        acc_ref[...] = jnp.zeros_like(acc_ref)

    y_pred = y_pred_ref[...].astype(jnp.float32)   # bf16 fast path: upcast in VMEM
    is_pos = y_true_ref[...] != 0                  # works for f32 / bf16 / int8 / bool

    neg_pred = -y_pred
    # Row-wise maxima of the two masked views; the appended 0 logit -> max(.., 0).
    m_pos = jnp.maximum(
        jnp.max(jnp.where(is_pos, neg_pred, -BIG), axis=-1, keepdims=True), 0.0)
    m_neg = jnp.maximum(
        jnp.max(jnp.where(is_pos, -BIG, y_pred), axis=-1, keepdims=True), 0.0)

    # Single exp per element: pick the branch first, exponentiate once, then split
    # the row sums with selects (s_neg = s_all - s_pos_part).
    t = jnp.where(is_pos, neg_pred - m_pos, y_pred - m_neg)
    e = jnp.exp(t)
    e_pos = jnp.where(is_pos, e, 0.0)
    s_pos_part = jnp.sum(e_pos, axis=-1, keepdims=True)
    s_all = jnp.sum(e, axis=-1, keepdims=True)
    s_pos = s_pos_part + jnp.exp(-m_pos)
    s_neg = (s_all - s_pos_part) + jnp.exp(-m_neg)

    loss = m_pos + jnp.log(s_pos) + m_neg + jnp.log(s_neg)      # (tile_r, 1)

    # Mask rows that only exist because of the partial last block / part overshoot.
    # jnp.where is a select, so any inf/NaN produced by garbage rows is dropped.
    row_start = pl.program_id(0) * rows_per_part + i * tile_r
    row_ids = row_start + jax.lax.broadcasted_iota(jnp.int32, (tile_r, 1), 0)
    loss = jnp.where(row_ids < rows, loss, 0.0)

    acc_ref[...] += jnp.broadcast_to(jnp.sum(loss), acc_ref.shape)

    @pl.when(i == pl.num_programs(1) - 1)
    def _finalize():
        total = jnp.sum(acc_ref[...])
        out_ref[...] = jnp.broadcast_to(total, out_ref.shape).astype(out_ref.dtype)


def _choose_tile_r(rows, cols, parts, pred_bytes, true_bytes):
    # Row alignment keyed off the narrowest input dtype (f32 -> 8, bf16 -> 16, i8 -> 32).
    row_align = {1: 32, 2: 16, 4: 8}.get(min(pred_bytes, true_bytes), 8)
    # Double-buffered input blocks stay under ~8 MiB; block-sized f32 temporaries plus
    # the 32 MiB scoped limit leave headroom on v5e/v6e (128 MiB) and v7x (64 MiB).
    budget_bytes = 8 * 1024 * 1024
    per_row = cols * (pred_bytes + true_bytes) * 2
    t = max(row_align, (budget_bytes // per_row) // row_align * row_align)
    t = min(t, 4096)                          # lifted 1024 cap for small class counts
    rows_per_part = pl.cdiv(rows, parts)
    needed = int(pl.cdiv(rows_per_part, row_align)) * row_align
    return int(min(t, max(needed, row_align)))


def _mlcce(y_pred, y_true):
    """y_pred, y_true: [..., num_classes] -> scalar mean loss (float32)."""
    assert y_pred.shape == y_true.shape
    cols = y_pred.shape[-1]
    yp = y_pred.reshape(-1, cols)             # no pad, no cast (perf review)
    yt = y_true.reshape(-1, cols)
    rows = yp.shape[0]

    parts = _num_parts()
    tile_r = _choose_tile_r(rows, cols, parts, yp.dtype.itemsize, yt.dtype.itemsize)
    tiles_total = int(pl.cdiv(rows, tile_r))
    tiles_per_part = int(pl.cdiv(tiles_total, parts))
    rows_per_part = tiles_per_part * tile_r
    last_tile = tiles_total - 1

    kernel = functools.partial(
        _mlcce_kernel, tile_r=tile_r, rows=rows, rows_per_part=rows_per_part)

    if parts * tiles_per_part == tiles_total:
        def in_map(p, i):
            return (p * tiles_per_part + i, 0)
    else:
        def in_map(p, i):
            # Clamp so part overshoot never points at a fully out-of-bounds block;
            # the overshoot rows are masked in-kernel via row_ids < rows.
            return (jnp.minimum(p * tiles_per_part + i, last_tile), 0)

    in_spec = pl.BlockSpec((tile_r, cols), in_map)

    out = pl.pallas_call(
        kernel,
        grid_spec=pltpu.PrefetchScalarGridSpec(
            num_scalar_prefetch=0,
            grid=(parts, tiles_per_part),
            in_specs=[in_spec, in_spec],
            out_specs=pl.BlockSpec((_SUBLANE, _LANE), lambda p, i: (0, p)),
            scratch_shapes=[pltpu.VMEM((1, 1), jnp.float32)],
        ),
        out_shape=jax.ShapeDtypeStruct((_SUBLANE, parts * _LANE), jnp.float32),
        compiler_params=pltpu.CompilerParams(
            dimension_semantics=("parallel", "arbitrary"),
            vmem_limit_bytes=32 * 1024 * 1024,
        ),
        cost_estimate=pl.CostEstimate(
            flops=8 * rows * cols,
            transcendentals=rows * cols + 4 * rows,
            bytes_accessed=rows * cols * (yp.dtype.itemsize + yt.dtype.itemsize)
            + _SUBLANE * parts * _LANE * 4,
        ),
    )(yp, yt)

    partial_sums = out[0, ::_LANE]            # (parts,) per-part partial sums
    return jnp.sum(partial_sums) / rows


# Whole wrapper (reshape / kernel / epilogue) under one jit so preprocessing fuses
# with the producer and the tiny epilogue stays on-device.
multilabel_categorical_crossentropy = jax.jit(_mlcce)


def _reference(y_pred, y_true):
    y_pred = (1.0 - 2.0 * y_true) * y_pred
    y_pred_pos = y_pred - (1.0 - y_true) * BIG
    y_pred_neg = y_pred - y_true * BIG
    zeros = jnp.zeros_like(y_pred_pos[..., :1])
    y_pred_pos = jnp.concatenate([y_pred_pos, zeros], axis=-1)
    y_pred_neg = jnp.concatenate([y_pred_neg, zeros], axis=-1)
    pos_loss = jax.scipy.special.logsumexp(y_pred_pos, axis=-1)
    neg_loss = jax.scipy.special.logsumexp(y_pred_neg, axis=-1)
    return jnp.mean(pos_loss + neg_loss)


if __name__ == "__main__":
    key = jax.random.PRNGKey(0)
    k1, k2, k3, k4, k5, k6 = jax.random.split(key, 6)

    # Case 1: small [..., num_classes] shape implied by the module docstring.
    batch, seq, num_classes = 2, 8, 32
    y_pred = jax.random.normal(k1, (batch, seq, num_classes), dtype=jnp.float32) * 3.0
    y_true = (jax.random.uniform(k2, (batch, seq, num_classes)) < 0.2).astype(jnp.float32)
    loss = multilabel_categorical_crossentropy(y_pred, y_true)
    jax.block_until_ready(loss)
    ref = _reference(y_pred, y_true)
    assert jnp.allclose(loss, ref, rtol=1e-5, atol=1e-5), (loss, ref)

    # Case 2: ragged row count (148 rows, not a multiple of 8) -> exercises the
    # un-padded partial-block stream + in-kernel row masking.
    y_pred2 = jax.random.normal(k3, (4, 37, 96), dtype=jnp.float32) * 2.0
    y_true2 = (jax.random.uniform(k4, (4, 37, 96)) < 0.15).astype(jnp.float32)
    loss2 = multilabel_categorical_crossentropy(y_pred2, y_true2)
    jax.block_until_ready(loss2)
    ref2 = _reference(y_pred2, y_true2)
    assert jnp.allclose(loss2, ref2, rtol=1e-5, atol=1e-5), (loss2, ref2)

    # Case 3: bf16-logits fast path (no wrapper cast; kernel upcasts in VMEM).
    y_pred3 = (jax.random.normal(k5, (2, 16, 64), dtype=jnp.float32) * 2.0).astype(jnp.bfloat16)
    y_true3 = (jax.random.uniform(k6, (2, 16, 64)) < 0.25).astype(jnp.float32)
    loss3 = multilabel_categorical_crossentropy(y_pred3, y_true3)
    jax.block_until_ready(loss3)
    ref3 = _reference(y_pred3.astype(jnp.float32), y_true3)
    assert jnp.allclose(loss3, ref3, rtol=1e-5, atol=1e-5), (loss3, ref3)

    print("KERNEL_OK")
</pallas_src>

<mosaic_0001>
module attributes {stable_mosaic.version = 11 : i64} {
  func.func @_mlcce_kernel(%arg0: i32, %arg1: i32, %arg2: memref<16x32xf32, #tpu.memory_space<vmem>>, %arg3: memref<16x32xf32, #tpu.memory_space<vmem>>, %arg4: memref<8x128xf32, #tpu.memory_space<vmem>>, %arg5: memref<1x1xf32, #tpu.memory_space<vmem>>) attributes {dimension_semantics = [#tpu.dimension_semantics<parallel>, #tpu.dimension_semantics<arbitrary>], iteration_bounds = array<i64: 1, 1>, scalar_prefetch = 0 : i64, scratch_operands = 1 : i64, tpu.core_type = #tpu.core_type<tc>, window_params = [{transform_indices = @transform_0, window_bounds = array<i64: 16, 32>}, {transform_indices = @transform_1, window_bounds = array<i64: 16, 32>}, {transform_indices = @transform_2, window_bounds = array<i64: 8, 128>}]} {
    %c0_i32 = arith.constant 0 : i32
    %0 = arith.cmpi eq, %arg1, %c0_i32 : i32
    %1 = arith.extui %0 : i1 to i32
    %c0_i32_0 = arith.constant 0 : i32
    %2 = arith.cmpi ne, %1, %c0_i32_0 : i32
    scf.if %2 {
      %cst_26 = arith.constant 0.000000e+00 : f32
      %68 = vector.broadcast %cst_26 : f32 to vector<1x1xf32>
      %c0_27 = arith.constant 0 : index
      %c0_28 = arith.constant 0 : index
      %69 = vector.load %arg5[%c0_27, %c0_28] : memref<1x1xf32, #tpu.memory_space<vmem>>, vector<1x1xf32>
      tpu.vector_store %arg5[%c0_27, %c0_28], %68 {strides = array<i32>} : memref<1x1xf32, #tpu.memory_space<vmem>>, vector<1x1xf32>,
    } else {
    }
    %c0 = arith.constant 0 : index
    %c0_1 = arith.constant 0 : index
    %3 = vector.load %arg2[%c0, %c0_1] : memref<16x32xf32, #tpu.memory_space<vmem>>, vector<16x32xf32>
    %c0_2 = arith.constant 0 : index
    %c0_3 = arith.constant 0 : index
    %4 = vector.load %arg3[%c0_2, %c0_3] : memref<16x32xf32, #tpu.memory_space<vmem>>, vector<16x32xf32>
    %cst = arith.constant 0.000000e+00 : f32
    %5 = vector.broadcast %cst : f32 to vector<16x32xf32>
    %6 = arith.cmpf one, %4, %5 : vector<16x32xf32>
    %cst_4 = arith.constant 0.000000e+00 : f32
    %7 = vector.broadcast %cst_4 : f32 to vector<16x32xf32>
    %8 = arith.subf %7, %3 : vector<16x32xf32>
    %cst_5 = arith.constant -9.99999995E+11 : f32
    %9 = vector.broadcast %cst_5 : f32 to vector<16x32xf32>
    %10 = arith.select %6, %8, %9 : vector<16x32xi1>, vector<16x32xf32>
    %cst_6 = arith.constant dense<0xFF800000> : vector<16xf32>
    %11 = vector.multi_reduction <maximumf>, %10, %cst_6 [1] : vector<16x32xf32> to vector<16xf32>
    %12 = vector.shape_cast %11 : vector<16xf32> to vector<16x1xf32>
    %cst_7 = arith.constant 0.000000e+00 : f32
    %13 = vector.broadcast %cst_7 : f32 to vector<16x1xf32>
    %14 = arith.maximumf %12, %13 : vector<16x1xf32>
    %cst_8 = arith.constant -9.99999995E+11 : f32
    %15 = vector.broadcast %cst_8 : f32 to vector<16x32xf32>
    %16 = arith.select %6, %15, %3 : vector<16x32xi1>, vector<16x32xf32>
    %cst_9 = arith.constant dense<0xFF800000> : vector<16xf32>
    %17 = vector.multi_reduction <maximumf>, %16, %cst_9 [1] : vector<16x32xf32> to vector<16xf32>
    %18 = vector.shape_cast %17 : vector<16xf32> to vector<16x1xf32>
    %cst_10 = arith.constant 0.000000e+00 : f32
    %19 = vector.broadcast %cst_10 : f32 to vector<16x1xf32>
    %20 = arith.maximumf %18, %19 : vector<16x1xf32>
    %21 = vector.broadcast %14 : vector<16x1xf32> to vector<16x32xf32>
    %22 = arith.subf %8, %21 : vector<16x32xf32>
    %23 = vector.broadcast %20 : vector<16x1xf32> to vector<16x32xf32>
    %24 = arith.subf %3, %23 : vector<16x32xf32>
    %25 = arith.select %6, %22, %24 : vector<16x32xi1>, vector<16x32xf32>
    %26 = math.exp %25 : vector<16x32xf32>
    %cst_11 = arith.constant 0.000000e+00 : f32
    %27 = vector.broadcast %cst_11 : f32 to vector<16x32xf32>
    %28 = arith.select %6, %26, %27 : vector<16x32xi1>, vector<16x32xf32>
    %cst_12 = arith.constant dense<0.000000e+00> : vector<16xf32>
    %29 = vector.multi_reduction <add>, %28, %cst_12 [1] : vector<16x32xf32> to vector<16xf32>
    %30 = vector.shape_cast %29 : vector<16xf32> to vector<16x1xf32>
    %cst_13 = arith.constant dense<0.000000e+00> : vector<16xf32>
    %31 = vector.multi_reduction <add>, %26, %cst_13 [1] : vector<16x32xf32> to vector<16xf32>
    %32 = vector.shape_cast %31 : vector<16xf32> to vector<16x1xf32>
    %cst_14 = arith.constant 0.000000e+00 : f32
    %33 = vector.broadcast %cst_14 : f32 to vector<16x1xf32>
    %34 = arith.subf %33, %14 : vector<16x1xf32>
    %35 = math.exp %34 : vector<16x1xf32>
    %36 = arith.addf %30, %35 : vector<16x1xf32>
    %37 = arith.subf %32, %30 : vector<16x1xf32>
    %cst_15 = arith.constant 0.000000e+00 : f32
    %38 = vector.broadcast %cst_15 : f32 to vector<16x1xf32>
    %39 = arith.subf %38, %20 : vector<16x1xf32>
    %40 = math.exp %39 : vector<16x1xf32>
    %41 = arith.addf %37, %40 : vector<16x1xf32>
    %42 = math.log %36 : vector<16x1xf32>
    %43 = arith.addf %14, %42 : vector<16x1xf32>
    %44 = arith.addf %43, %20 : vector<16x1xf32>
    %45 = math.log %41 : vector<16x1xf32>
    %46 = arith.addf %44, %45 : vector<16x1xf32>
    %c16_i32 = arith.constant 16 : i32
    %47 = arith.muli %arg0, %c16_i32 : i32
    %c16_i32_16 = arith.constant 16 : i32
    %48 = arith.muli %arg1, %c16_i32_16 : i32
    %49 = arith.addi %47, %48 : i32
    %50 = tpu.iota {dimensions = array<i32: 0>} : vector<16x1xi32>
    %51 = vector.broadcast %49 : i32 to vector<16x1xi32>
    %52 = arith.addi %51, %50 : vector<16x1xi32>
    %c16_i32_17 = arith.constant 16 : i32
    %53 = vector.broadcast %c16_i32_17 : i32 to vector<16x1xi32>
    %54 = arith.cmpi slt, %52, %53 : vector<16x1xi32>
    %cst_18 = arith.constant 0.000000e+00 : f32
    %55 = vector.broadcast %cst_18 : f32 to vector<16x1xf32>
    %56 = arith.select %54, %46, %55 : vector<16x1xi1>, vector<16x1xf32>
    %c0_19 = arith.constant 0 : index
    %c0_20 = arith.constant 0 : index
    %57 = vector.load %arg5[%c0_19, %c0_20] : memref<1x1xf32, #tpu.memory_space<vmem>>, vector<1x1xf32>
    %58 = vector.shape_cast %56 : vector<16x1xf32> to vector<1x16x1xf32>
    %cst_21 = arith.constant dense<0.000000e+00> : vector<1xf32>
    %59 = vector.multi_reduction <add>, %58, %cst_21 [1, 2] : vector<1x16x1xf32> to vector<1xf32>
    %60 = vector.shape_cast %59 : vector<1xf32> to vector<1x1x1xf32>
    %61 = vector.extract %60[0, 0, 0] : f32 from vector<1x1x1xf32>
    %62 = vector.broadcast %61 : f32 to vector<1x1xf32>
    %63 = arith.addf %57, %62 : vector<1x1xf32>
    %c0_22 = arith.constant 0 : index
    %c0_23 = arith.constant 0 : index
    %64 = vector.load %arg5[%c0_22, %c0_23] : memref<1x1xf32, #tpu.memory_space<vmem>>, vector<1x1xf32>
    tpu.vector_store %arg5[%c0_22, %c0_23], %63 {strides = array<i32>} : memref<1x1xf32, #tpu.memory_space<vmem>>, vector<1x1xf32>,
    %c0_i32_24 = arith.constant 0 : i32
    %65 = arith.cmpi eq, %arg1, %c0_i32_24 : i32
    %66 = arith.extui %65 : i1 to i32
    %c0_i32_25 = arith.constant 0 : i32
    %67 = arith.cmpi ne, %66, %c0_i32_25 : i32
    scf.if %67 {
      %c0_26 = arith.constant 0 : index
      %c0_27 = arith.constant 0 : index
      %68 = vector.load %arg5[%c0_26, %c0_27] : memref<1x1xf32, #tpu.memory_space<vmem>>, vector<1x1xf32>
      %69 = vector.shape_cast %68 : vector<1x1xf32> to vector<1x1x1xf32>
      %cst_28 = arith.constant dense<0.000000e+00> : vector<1xf32>
      %70 = vector.multi_reduction <add>, %69, %cst_28 [1, 2] : vector<1x1x1xf32> to vector<1xf32>
      %71 = vector.shape_cast %70 : vector<1xf32> to vector<1x1x1xf32>
      %72 = vector.extract %71[0, 0, 0] : f32 from vector<1x1x1xf32>
      %73 = vector.broadcast %72 : f32 to vector<8x128xf32>
      %c0_29 = arith.constant 0 : index
      %c0_30 = arith.constant 0 : index
      %74 = vector.load %arg4[%c0_29, %c0_30] : memref<8x128xf32, #tpu.memory_space<vmem>>, vector<8x128xf32>
      tpu.vector_store %arg4[%c0_29, %c0_30], %73 {strides = array<i32>} : memref<8x128xf32, #tpu.memory_space<vmem>>, vector<8x128xf32>,
    } else {
    }
    return
  }
  func.func @transform_0(%arg0: i32, %arg1: i32) -> (i32, i32) {
    %c1_i32 = arith.constant 1 : i32
    %0 = arith.muli %arg0, %c1_i32 : i32
    %1 = arith.addi %0, %arg1 : i32
    %c0_i32 = arith.constant 0 : i32
    %c0_i32_0 = arith.constant 0 : i32
    return %1, %c0_i32 : i32, i32
  }
  func.func @transform_1(%arg0: i32, %arg1: i32) -> (i32, i32) {
    %c1_i32 = arith.constant 1 : i32
    %0 = arith.muli %arg0, %c1_i32 : i32
    %1 = arith.addi %0, %arg1 : i32
    %c0_i32 = arith.constant 0 : i32
    %c0_i32_0 = arith.constant 0 : i32
    return %1, %c0_i32 : i32, i32
  }
  func.func @transform_2(%arg0: i32, %arg1: i32) -> (i32, i32) {
    %c0_i32 = arith.constant 0 : i32
    %c0_i32_0 = arith.constant 0 : i32
    return %c0_i32, %arg0 : i32, i32
  }
}

</mosaic_0001>

<llo_original>
// kernel: _mlcce.1
$region0: #{_mlcce.1}
  #allocation0 [shape = 'u32[]', space=smem, size = 0x4, offset = 0x4, fixed_abs, tag = 'smem constant byte address 0x4 - core index']
  #allocation1 [shape = 'u32[72,128]{1,0:T(1,128)}', space=vmem, size = 0x9000, scoped, tag = 'internal scratch']
  #allocation2 [shape = 'f32[1,1]{1,0:T(1,128)}', space=vmem, size = 0x200, scoped, tag = 'scratch operand']
  %s0 = inlined_call_operand.hbm [shape: f32[16,32], index: 0, kind: input, shape index: {}]
  %s1 = inlined_call_operand.hbm [shape: f32[16,32], index: 1, kind: input, shape index: {}]
  %s2 = inlined_call_operand.vmem [shape: f32[8,128], index: 2, kind: output, shape index: {}]
  %s3 = sld [smem:[#allocation0]]
  $region34: #{_mlcce.1} parent=0
    _
  %s5 = ssub.s32 1, %s3
  %s6 = scalar_select 0, %s5, %s3
  $region1: #{_mlcce.1} parent=0
    #allocation3 [shape = 'u8[8192]{0}', space=vmem, size = 0x2000, scoped, tag = 'input window, operand 0, single buffered']
    #allocation4 [shape = 's32[1]{0}', space=sflag, size = 0x4, scoped, tag = 'scoped memory for _mlcce.1']
    #allocation5 [shape = 'u8[8192]{0}', space=vmem, size = 0x2000, scoped, tag = 'input window, operand 1, single buffered']
    #allocation6 [shape = 's32[1]{0}', space=sflag, size = 0x4, scoped, tag = 'scoped memory for _mlcce.1']
    %7 = vsyncpa [#allocation4], 0
    %8 = vsyncpa [#allocation6], 0
    // Predicated region
    $region2: #{_mlcce.1} parent=1 // pred_check
      _
    $region3: #{_mlcce.1} parent=1 // pred_check_branch
      %10 = sbr.rel (0) target = $region5
    $region4: #{_mlcce.1} parent=1 // pred_region
      %s11 = sadd.s32 0, 0
      %s12 = smul.u32 2, %s11
      %14 = vsyncadd [#allocation4], 0
      %s15 = smul.addr %s12, 8
      %s16 = scalar_lea.hbm %s0, %s15
      %s17 = sshll.u32 %s16, 4
      %s18 = int_to_ptr.hbm [resolvable:$true] %s17
      %s19 = sshll.u32 [#allocation3], 4
      %s20 = int_to_ptr.vmem [resolvable:$true] %s19
      %25 = dma.hbm_to_vmem [thread:$0]  %s18, 256, %s20, [#allocation4], 128, 128, 8
    $region5: #{_mlcce.1} parent=1 // pred_fallthru
      _
    // Predicated region
    $region6: #{_mlcce.1} parent=1 // pred_check
      _
    $region7: #{_mlcce.1} parent=1 // pred_check_branch
      %27 = sbr.rel (0) target = $region9
    $region8: #{_mlcce.1} parent=1 // pred_region
      %s28 = sadd.s32 0, 0
      %s29 = smul.u32 2, %s28
      %31 = vsyncadd [#allocation6], 0
      %s32 = smul.addr %s29, 8
      %s33 = scalar_lea.hbm %s1, %s32
      %s34 = sshll.u32 %s33, 4
      %s35 = int_to_ptr.hbm [resolvable:$true] %s34
      %s36 = sshll.u32 [#allocation5], 4
      %s37 = int_to_ptr.vmem [resolvable:$true] %s36
      %42 = dma.hbm_to_vmem [thread:$0]  %s35, 256, %s37, [#allocation6], 128, 128, 8
    $region9: #{_mlcce.1} parent=1 // pred_fallthru
      _
    // Predicated region
    $region10: #{_mlcce.1} parent=1 // pred_check
      _
    $region11: #{_mlcce.1} parent=1 // pred_check_branch
      %44 = sbr.rel (0) target = $region13
    $region12: #{_mlcce.1} parent=1 // pred_region
      %46 = dma.done [#allocation4], 256
    $region13: #{_mlcce.1} parent=1 // pred_fallthru
      _
    // Predicated region
    $region14: #{_mlcce.1} parent=1 // pred_check
      _
    $region15: #{_mlcce.1} parent=1 // pred_check_branch
      %48 = sbr.rel (0) target = $region17
    $region16: #{_mlcce.1} parent=1 // pred_region
      %50 = dma.done [#allocation6], 256
    $region17: #{_mlcce.1} parent=1 // pred_fallthru
      _
    %s51 = sadd.s32 0, 0
    %s52 = smul.u32 2, %s51
    %s53 = sadd.s32 0, 0
    %s54 = smul.u32 2, %s53
    %p55 = scmp.eq.s32.totalorder 0, 0
    // Predicated region
    $region18: #{_mlcce.1} parent=1 // pred_check
      %p56 = pneg %p55
    $region19: #{_mlcce.1} parent=1 // pred_check_branch
      %58 = sbr.rel (%p56) target = $region21
    $region20: #{_mlcce.1} parent=1 // pred_region
      %vm59 = vcmask 0
      %60 = vst.msk [vmem:[#allocation2] sm:$0x1] %vm59, 0.0
    $region21: #{_mlcce.1} parent=1 // pred_fallthru
      _
    %v61 = vld [vmem:[#allocation3] sm:$0xff]
    %v62 = vld [vmem:[#allocation3 + $0x8] sm:$0xff]
    %v63 = vld [vmem:[#allocation5] sm:$0xff]
    %v64 = vld [vmem:[#allocation5 + $0x8] sm:$0xff]
    %vm65 = vcmp.ne.f32.partialorder %v63, 0.0
    %vm66 = vcmp.ne.f32.partialorder %v64, 0.0
    %v67 = vsub.f32 0.0, %v61
    %v68 = vsub.f32 0.0, %v62
    %v69 = vsel %vm65, %v67, -1e+12
    %v70 = vsel %vm66, %v68, -1e+12
    %vm71 = vcmask 261120
    %v72 = vsel %vm71, %v69, -inf
    %73 = vmax.xlane.f32.xlu0 %v72
    %v74 = vpop.xlane.xlu0 %73
    %v75 = vsel %vm71, %v70, -inf
    %76 = vmax.xlane.f32.xlu0 %v75
    %v77 = vpop.xlane.xlu0 %76
    %v78 = vmax.f32 %v74, 0.0
    %v79 = vmax.f32 %v77, 0.0
    %v80 = vsel %vm65, -1e+12, %v61
    %v81 = vsel %vm66, -1e+12, %v62
    %v82 = vsel %vm71, %v80, -inf
    %83 = vmax.xlane.f32.xlu0 %v82
    %v84 = vpop.xlane.xlu0 %83
    %v85 = vsel %vm71, %v81, -inf
    %86 = vmax.xlane.f32.xlu0 %v85
    %v87 = vpop.xlane.xlu0 %86
    %v88 = vmax.f32 %v84, 0.0
    %v89 = vmax.f32 %v87, 0.0
    %v90 = vsub.f32 %v67, %v78
    %v91 = vsub.f32 %v68, %v79
    %v92 = vsub.f32 %v61, %v88
    %v93 = vsub.f32 %v62, %v89
    %v94 = vsel %vm65, %v90, %v92
    %v95 = vsel %vm66, %v91, %v93
    %v96 = vmul.f32 %v94, 1.442695
    %v97 = vpow.pop %v96
    %v98 = vmul.f32 %v95, 1.442695
    %v99 = vpow.pop %v98
    %v100 = vsel %vm65, %v97, 0.0
    %v101 = vsel %vm66, %v99, 0.0
    %v102 = vsel %vm71, %v100, 0.0
    %103 = vadd.xlane.f32.xlu0 %v102
    %v104 = vpop.xlane.xlu0 %103
    %v105 = vsel %vm71, %v101, 0.0
    %106 = vadd.xlane.f32.xlu0 %v105
    %v107 = vpop.xlane.xlu0 %106
    %v108 = vsel %vm71, %v97, 0.0
    %109 = vadd.xlane.f32.xlu0 %v108
    %v110 = vpop.xlane.xlu0 %109
    %v111 = vsel %vm71, %v99, 0.0
    %112 = vadd.xlane.f32.xlu0 %v111
    %v113 = vpop.xlane.xlu0 %112
    %v114 = vsub.f32 0.0, %v78
    %v115 = vsub.f32 0.0, %v79
    %v116 = vmul.f32 %v114, 1.442695
    %v117 = vpow.pop %v116
    %v118 = vmul.f32 %v115, 1.442695
    %v119 = vpow.pop %v118
    %v120 = vadd.f32 %v104, %v117
    %v121 = vadd.f32 %v107, %v119
    %v122 = vsub.f32 %v110, %v104
    %v123 = vsub.f32 %v113, %v107
    %v124 = vsub.f32 0.0, %v88
    %v125 = vsub.f32 0.0, %v89
    %v126 = vmul.f32 %v124, 1.442695
    %v127 = vpow.pop %v126
    %v128 = vmul.f32 %v125, 1.442695
    %v129 = vpow.pop %v128
    %v130 = vadd.f32 %v122, %v127
    %v131 = vadd.f32 %v123, %v129
    %v132 = vlog2.pop %v120
    %v133 = vmul.f32 %v132, 0.6931472
    %v134 = vlog2.pop %v121
    %v135 = vmul.f32 %v134, 0.6931472
    %v136 = vadd.f32 %v78, %v133
    %v137 = vadd.f32 %v79, %v135
    %v138 = vadd.f32 %v136, %v88
    %v139 = vadd.f32 %v137, %v89
    %v140 = vlog2.pop %v130
    %v141 = vmul.f32 %v140, 0.6931472
    %v142 = vlog2.pop %v131
    %v143 = vmul.f32 %v142, 0.6931472
    %v144 = vadd.f32 %v138, %v141
    %v145 = vadd.f32 %v139, %v143
    %s146 = smul.u32 0, 16
    %s147 = smul.u32 0, 16
    %s148 = sadd.s32 %s146, %s147
    %v149 = vlaneseq
    %v150 = vshrl.u32 %v149, 7
    %v151 = vadd.s32 %v150, 8
    %v152 = vstv %s148
    %v153 = vadd.s32 %v152, %v150
    %v154 = vadd.s32 %v152, %v151
    %vm155 = vcmp.lt.s32.totalorder %v153, 16
    %vm156 = vcmp.lt.s32.totalorder %v154, 16
    %v157 = vsel %vm155, %v144, 0.0
    %v158 = vsel %vm156, %v145, 0.0
    %v159 = vld [vmem:[#allocation2] sm:$0x1]
    %vm160 = vcmask 7168
    %v161 = vsel %vm160, %v157, 0.0
    %v162 = vsel %vm160, %v158, 0.0
    %v163 = vadd.f32 %v161, %v162
    %164 = vadd.xlane.f32.xlu0 %v163
    %v165 = vpop.xlane.xlu0 %164
    %v166 = vrot.slane %v165, 4
    %v167 = vadd.f32 %v165, %v166
    %v168 = vrot.slane %v167, 2
    %v169 = vadd.f32 %v167, %v168
    %v170 = vrot.slane %v169, 1
    %v171 = vadd.f32 %v169, %v170
    %s172 = vtos %v171
    %v173 = vstv %s172
    %v174 = vadd.f32 %v159, %v173
    %vm175 = vcmask 0
    %176 = vst.msk [vmem:[#allocation2] sm:$0x1] %vm175, %v174
    // Predicated region
    $region22: #{_mlcce.1} parent=1 // pred_check
      %p177 = pneg %p55
    $region23: #{_mlcce.1} parent=1 // pred_check_branch
      %179 = sbr.rel (%p177) target = $region25
    $region24: #{_mlcce.1} parent=1 // pred_region
      %v180 = vld [vmem:[#allocation2] sm:$0x1]
      %v181 = vadd.f32 %v180, 0.0
      %s182 = vtos %v181
      %v183 = vstv %s182
      %184 = vst [vmem:[%s2] sm:$0xff] %v183
    $region25: #{_mlcce.1} parent=1 // pred_fallthru
      _
    // Predicated region
    $region26: #{_mlcce.1} parent=1 // pred_check
      _
    $region27: #{_mlcce.1} parent=1 // pred_check_branch
      %186 = sbr.rel (0) target = $region29
    $region28: #{_mlcce.1} parent=1 // pred_region
      _
    $region29: #{_mlcce.1} parent=1 // pred_fallthru
      _
    // Predicated region
    $region30: #{_mlcce.1} parent=1 // pred_check
      _
    $region31: #{_mlcce.1} parent=1 // pred_check_branch
      %188 = sbr.rel (0) target = $region33
    $region32: #{_mlcce.1} parent=1 // pred_region
      _
    $region33: #{_mlcce.1} parent=1 // pred_fallthru
      _
    %189 = vsyncpa [#allocation4], 1
    %190 = vsyncpa [#allocation6], 1

</llo_original>
